<compile_context>
chip_gen: v7x
topology: tpu7x:2x2x1
jax: 0.10.0
libtpu: 0.0.40
codegen_flags: <defaults>
</compile_context>

<pallas_src>
import functools
import math

import jax
import jax.numpy as jnp
import numpy as np
from jax.experimental import pallas as pl
from jax.experimental.pallas import tpu as pltpu

NOISE_SCALE = 5000.0

# ----------------------------------------------------------------------------
# Shared-range-reduction sincos (f32, valid for |x| up to ~1e5).
# pi/2 = A + B + C + D;  A, B, C have 8/9/9 significand bits -> q*A, q*B, q*C
# are exact f32 products for the quadrant counts that occur here.
_TWO_OVER_PI = 0.636619772367581343
_PIO2_A = 1.5703125                    # 8 significand bits
_PIO2_B = 4.8351287841796875e-04       # 9 significand bits  (507 * 2^-20)
_PIO2_C = 3.13855707645416259766e-07   # 9 significand bits  (337 * 2^-30)
_PIO2_D = 6.077100471e-11              # tail

# Cephes sinf / cosf minimax polynomials on [-pi/4, pi/4].
_SIN_P0 = -1.9515295891e-4
_SIN_P1 = 8.3321608736e-3
_SIN_P2 = -1.6666654611e-1
_COS_P0 = 2.443315711809948e-5
_COS_P1 = -1.388731625493765e-3
_COS_P2 = 4.166664568298827e-2


def _sincos(x):
    """Return (sin(x), cos(x)) f32 with one shared range reduction (VALU only)."""
    qf = jnp.floor(x * _TWO_OVER_PI + 0.5)     # nearest quadrant index
    q = qf.astype(jnp.int32)
    r = x - qf * _PIO2_A                        # exact
    r = r - qf * _PIO2_B                        # exact
    r = r - qf * _PIO2_C                        # ~1 ulp
    r = r - qf * _PIO2_D
    z = r * r
    s = ((_SIN_P0 * z + _SIN_P1) * z + _SIN_P2) * z * r + r
    c = ((_COS_P0 * z + _COS_P1) * z + _COS_P2) * z * z - 0.5 * z + 1.0
    swap = (q & 1) == 1                 # odd quadrants swap sin <-> cos
    neg_sin = (q & 2) != 0              # quadrants 2, 3 negate sin
    neg_cos = ((q + 1) & 2) != 0        # quadrants 1, 2 negate cos
    sin_v = jnp.where(swap, c, s)
    cos_v = jnp.where(swap, s, c)
    sin_v = jnp.where(neg_sin, -sin_v, sin_v)
    cos_v = jnp.where(neg_cos, -cos_v, cos_v)
    return sin_v, cos_v


# ----------------------------------------------------------------------------
def _noise_schedule_kernel(noise_ref, emb_ref, out_ref, *, half_dim):
    # noise_ref: [TB, 1] f32; emb_ref: [1, half_dim] f32 (NOISE_SCALE folded in)
    # out_ref:   [TB, 2*half_dim] (f32 or bf16)
    x = noise_ref[...] * emb_ref[...]          # [TB, half_dim] lane-broadcast (VPU)
    s, c = _sincos(x)                          # one shared range reduction
    out_ref[:, :half_dim] = s.astype(out_ref.dtype)
    out_ref[:, half_dim:] = c.astype(out_ref.dtype)


def make_emb(d_model: int) -> jnp.ndarray:
    """Deterministic frequency buffer identical to the module's __init__."""
    half_dim = d_model // 2
    denom = max(half_dim - 1, 1)               # guard d_model == 2
    scale = math.log(10000.0) / float(denom)
    return jnp.exp(jnp.arange(half_dim, dtype=jnp.float32) * -scale)


def _pick_tile_b(B: int, d_model: int, *, target_out_bytes: int = 4 << 20,
                 min_steps: int = 4) -> int:
    """Batch tile: ~4 MiB output tile, >= min_steps grid steps when B allows."""
    if B <= 8:
        return B
    # Per batch row in VMEM: output row + lane-padded (tile_b, 1) noise column
    # (only 1 of 128 lanes used => 512 bytes/row), each double-buffered.
    bytes_per_row = d_model * 4 + 512
    tb = max(8, target_out_bytes // bytes_per_row)
    tb = min(tb, max(8, pl.cdiv(B, min_steps)))   # keep the grid multi-step
    tb = max(8, (tb // 8) * 8)
    return min(tb, B)


def continuous_noise_schedule(noise: jnp.ndarray, emb: jnp.ndarray, *,
                              tile_b: int | None = None,
                              out_dtype=jnp.float32) -> jnp.ndarray:
    """noise: [B] or [B, 1]; emb: [half_dim] (unscaled) -> [B, 2*half_dim]."""
    if noise.ndim > 1:
        if noise.shape[-1] != 1:
            raise ValueError(f"noise trailing dim must be 1, got {noise.shape}")
        noise = jnp.squeeze(noise, axis=-1)
    if noise.ndim != 1:
        raise ValueError(f"noise must be [B] or [B, 1], got {noise.shape}")
    B = noise.shape[0]
    half_dim = emb.shape[-1]
    d_model = 2 * half_dim

    noise2d = noise.reshape(B, 1).astype(jnp.float32)
    # Fold NOISE_SCALE into the frequency row once, outside the kernel.
    emb2d = (NOISE_SCALE * emb.astype(jnp.float32)).reshape(1, half_dim)

    if tile_b is None:
        tile_b = _pick_tile_b(B, d_model)
    grid = (pl.cdiv(B, tile_b),)

    kernel = functools.partial(_noise_schedule_kernel, half_dim=half_dim)
    out_bytes = B * d_model * np.dtype(out_dtype).itemsize
    cost = pl.CostEstimate(
        flops=B * half_dim,                  # the exponent multiply
        transcendentals=B * d_model,         # one sin or cos per output element
        bytes_accessed=out_bytes + B * 4 + half_dim * 4,
    )

    return pl.pallas_call(
        kernel,
        out_shape=jax.ShapeDtypeStruct((B, d_model), out_dtype),
        grid=grid,
        in_specs=[
            pl.BlockSpec((tile_b, 1), lambda i: (i, 0)),     # per-tile noise rows
            pl.BlockSpec((1, half_dim), lambda i: (0, 0)),   # scaled emb, resident
        ],
        out_specs=pl.BlockSpec((tile_b, d_model), lambda i: (i, 0)),
        compiler_params=pltpu.CompilerParams(
            dimension_semantics=("parallel",),   # shard batch tiles across TCs (v7x)
            vmem_limit_bytes=32 << 20,           # headroom under v7x's 64 MiB VMEM
        ),
        cost_estimate=cost,
    )(noise2d, emb2d)


# ----------------------------------------------------------------------------
def _reference_f64(noise, emb):
    """float64 sin/cos of the same f32 exponents the kernel computes."""
    noise_np = np.asarray(noise, dtype=np.float32).reshape(-1)
    scaled_np = np.float32(NOISE_SCALE) * np.asarray(emb, dtype=np.float32)
    expo = (noise_np[:, None] * scaled_np[None, :]).astype(np.float64)
    return np.concatenate([np.sin(expo), np.cos(expo)], axis=-1)


if __name__ == "__main__":
    key = jax.random.PRNGKey(0)
    k1, k2 = jax.random.split(key)

    # 1) Small demo matching the module docstring: noise [B, 1], d_model = 32.
    d_model = 32
    batch = 8
    noise = jax.random.uniform(k1, (batch, 1), dtype=jnp.float32)
    emb = make_emb(d_model)
    out = jax.block_until_ready(continuous_noise_schedule(noise, emb))
    ref = _reference_f64(noise, emb)
    assert out.shape == (batch, d_model), out.shape
    err = float(np.max(np.abs(np.asarray(out, dtype=np.float64) - ref)))
    assert err < 2e-5, f"max abs err {err}"

    # 2) Multi-tile path: grid of 4 batch tiles, half_dim % 128 == 0 so both
    #    half stores are lane-dense full-width vst.
    d_model2 = 256
    batch2 = 64
    noise2 = jax.random.uniform(k2, (batch2,), dtype=jnp.float32)
    emb2 = make_emb(d_model2)
    out2 = jax.block_until_ready(
        continuous_noise_schedule(noise2, emb2, tile_b=16))      # grid=(4,)
    ref2 = _reference_f64(noise2, emb2)
    assert out2.shape == (batch2, d_model2), out2.shape
    err2 = float(np.max(np.abs(np.asarray(out2, dtype=np.float64) - ref2)))
    assert err2 < 2e-5, f"max abs err {err2}"

    # 3) bf16 output option (halves the dominant HBM write traffic on v5e).
    out3 = jax.block_until_ready(
        continuous_noise_schedule(noise2, emb2, tile_b=16, out_dtype=jnp.bfloat16))
    err3 = float(np.max(np.abs(np.asarray(out3, dtype=np.float64) - ref2)))
    assert err3 < 8e-3, f"max abs err {err3}"

    print("KERNEL_OK")
</pallas_src>

<mosaic_0001>
module attributes {stable_mosaic.version = 11 : i64} {
  func.func @_noise_schedule_kernel(%arg0: i32, %arg1: memref<8x1xf32, #tpu.memory_space<vmem>>, %arg2: memref<1x16xf32, #tpu.memory_space<vmem>>, %arg3: memref<8x32xf32, #tpu.memory_space<vmem>>) attributes {dimension_semantics = [#tpu.dimension_semantics<parallel>], iteration_bounds = array<i64: 1>, scalar_prefetch = 0 : i64, scratch_operands = 0 : i64, tpu.core_type = #tpu.core_type<tc>, window_params = [{transform_indices = @transform_0, window_bounds = array<i64: 8, 1>}, {pipeline_mode = #tpu.pipeline_mode<synchronous>, transform_indices = @transform_1, window_bounds = array<i64: 1, 16>}, {transform_indices = @transform_2, window_bounds = array<i64: 8, 32>}]} {
    %c0 = arith.constant 0 : index
    %c0_0 = arith.constant 0 : index
    %0 = vector.load %arg1[%c0, %c0_0] : memref<8x1xf32, #tpu.memory_space<vmem>>, vector<8x1xf32>
    %c0_1 = arith.constant 0 : index
    %c0_2 = arith.constant 0 : index
    %1 = vector.load %arg2[%c0_1, %c0_2] : memref<1x16xf32, #tpu.memory_space<vmem>>, vector<1x16xf32>
    %2 = vector.broadcast %0 : vector<8x1xf32> to vector<8x16xf32>
    %3 = vector.broadcast %1 : vector<1x16xf32> to vector<8x16xf32>
    %4 = arith.mulf %2, %3 : vector<8x16xf32>
    %cst = arith.constant 0.636619746 : f32
    %5 = vector.broadcast %cst : f32 to vector<8x16xf32>
    %6 = arith.mulf %4, %5 : vector<8x16xf32>
    %cst_3 = arith.constant 5.000000e-01 : f32
    %7 = vector.broadcast %cst_3 : f32 to vector<8x16xf32>
    %8 = arith.addf %6, %7 : vector<8x16xf32>
    %9 = math.floor %8 : vector<8x16xf32>
    %10 = arith.fptosi %9 : vector<8x16xf32> to vector<8x16xi32>
    %cst_4 = arith.constant 1.5703125 : f32
    %11 = vector.broadcast %cst_4 : f32 to vector<8x16xf32>
    %12 = arith.mulf %9, %11 : vector<8x16xf32>
    %13 = arith.subf %4, %12 : vector<8x16xf32>
    %cst_5 = arith.constant 4.83512878E-4 : f32
    %14 = vector.broadcast %cst_5 : f32 to vector<8x16xf32>
    %15 = arith.mulf %9, %14 : vector<8x16xf32>
    %16 = arith.subf %13, %15 : vector<8x16xf32>
    %cst_6 = arith.constant 3.13855708E-7 : f32
    %17 = vector.broadcast %cst_6 : f32 to vector<8x16xf32>
    %18 = arith.mulf %9, %17 : vector<8x16xf32>
    %19 = arith.subf %16, %18 : vector<8x16xf32>
    %cst_7 = arith.constant 6.07710063E-11 : f32
    %20 = vector.broadcast %cst_7 : f32 to vector<8x16xf32>
    %21 = arith.mulf %9, %20 : vector<8x16xf32>
    %22 = arith.subf %19, %21 : vector<8x16xf32>
    %23 = arith.mulf %22, %22 : vector<8x16xf32>
    %cst_8 = arith.constant -1.95152956E-4 : f32
    %24 = vector.broadcast %cst_8 : f32 to vector<8x16xf32>
    %25 = arith.mulf %24, %23 : vector<8x16xf32>
    %cst_9 = arith.constant 0.00833216123 : f32
    %26 = vector.broadcast %cst_9 : f32 to vector<8x16xf32>
    %27 = arith.addf %25, %26 : vector<8x16xf32>
    %28 = arith.mulf %27, %23 : vector<8x16xf32>
    %cst_10 = arith.constant -0.166666552 : f32
    %29 = vector.broadcast %cst_10 : f32 to vector<8x16xf32>
    %30 = arith.addf %28, %29 : vector<8x16xf32>
    %31 = arith.mulf %30, %23 : vector<8x16xf32>
    %32 = arith.mulf %31, %22 : vector<8x16xf32>
    %33 = arith.addf %32, %22 : vector<8x16xf32>
    %cst_11 = arith.constant 2.44331568E-5 : f32
    %34 = vector.broadcast %cst_11 : f32 to vector<8x16xf32>
    %35 = arith.mulf %34, %23 : vector<8x16xf32>
    %cst_12 = arith.constant -0.00138873165 : f32
    %36 = vector.broadcast %cst_12 : f32 to vector<8x16xf32>
    %37 = arith.addf %35, %36 : vector<8x16xf32>
    %38 = arith.mulf %37, %23 : vector<8x16xf32>
    %cst_13 = arith.constant 0.0416666456 : f32
    %39 = vector.broadcast %cst_13 : f32 to vector<8x16xf32>
    %40 = arith.addf %38, %39 : vector<8x16xf32>
    %41 = arith.mulf %40, %23 : vector<8x16xf32>
    %42 = arith.mulf %41, %23 : vector<8x16xf32>
    %cst_14 = arith.constant 5.000000e-01 : f32
    %43 = vector.broadcast %cst_14 : f32 to vector<8x16xf32>
    %44 = arith.mulf %43, %23 : vector<8x16xf32>
    %45 = arith.subf %42, %44 : vector<8x16xf32>
    %cst_15 = arith.constant 1.000000e+00 : f32
    %46 = vector.broadcast %cst_15 : f32 to vector<8x16xf32>
    %47 = arith.addf %45, %46 : vector<8x16xf32>
    %c1_i32 = arith.constant 1 : i32
    %48 = vector.broadcast %c1_i32 : i32 to vector<8x16xi32>
    %49 = arith.andi %10, %48 : vector<8x16xi32>
    %c1_i32_16 = arith.constant 1 : i32
    %50 = vector.broadcast %c1_i32_16 : i32 to vector<8x16xi32>
    %51 = arith.cmpi eq, %49, %50 : vector<8x16xi32>
    %c2_i32 = arith.constant 2 : i32
    %52 = vector.broadcast %c2_i32 : i32 to vector<8x16xi32>
    %53 = arith.andi %10, %52 : vector<8x16xi32>
    %c0_i32 = arith.constant 0 : i32
    %54 = vector.broadcast %c0_i32 : i32 to vector<8x16xi32>
    %55 = arith.cmpi ne, %53, %54 : vector<8x16xi32>
    %c1_i32_17 = arith.constant 1 : i32
    %56 = vector.broadcast %c1_i32_17 : i32 to vector<8x16xi32>
    %57 = arith.addi %10, %56 : vector<8x16xi32>
    %c2_i32_18 = arith.constant 2 : i32
    %58 = vector.broadcast %c2_i32_18 : i32 to vector<8x16xi32>
    %59 = arith.andi %57, %58 : vector<8x16xi32>
    %c0_i32_19 = arith.constant 0 : i32
    %60 = vector.broadcast %c0_i32_19 : i32 to vector<8x16xi32>
    %61 = arith.cmpi ne, %59, %60 : vector<8x16xi32>
    %62 = arith.select %51, %47, %33 : vector<8x16xi1>, vector<8x16xf32>
    %63 = arith.select %51, %33, %47 : vector<8x16xi1>, vector<8x16xf32>
    %cst_20 = arith.constant 0.000000e+00 : f32
    %64 = vector.broadcast %cst_20 : f32 to vector<8x16xf32>
    %65 = arith.subf %64, %62 : vector<8x16xf32>
    %66 = arith.select %55, %65, %62 : vector<8x16xi1>, vector<8x16xf32>
    %cst_21 = arith.constant 0.000000e+00 : f32
    %67 = vector.broadcast %cst_21 : f32 to vector<8x16xf32>
    %68 = arith.subf %67, %63 : vector<8x16xf32>
    %69 = arith.select %61, %68, %63 : vector<8x16xi1>, vector<8x16xf32>
    %c0_22 = arith.constant 0 : index
    %c0_23 = arith.constant 0 : index
    %70 = vector.load %arg3[%c0_22, %c0_23] : memref<8x32xf32, #tpu.memory_space<vmem>>, vector<8x16xf32>
    tpu.vector_store %arg3[%c0_22, %c0_23], %66 {strides = array<i32>} : memref<8x32xf32, #tpu.memory_space<vmem>>, vector<8x16xf32>,
    %c0_24 = arith.constant 0 : index
    %c16 = arith.constant 16 : index
    %71 = vector.load %arg3[%c0_24, %c16] : memref<8x32xf32, #tpu.memory_space<vmem>>, vector<8x16xf32>
    tpu.vector_store %arg3[%c0_24, %c16], %69 {strides = array<i32>} : memref<8x32xf32, #tpu.memory_space<vmem>>, vector<8x16xf32>,
    return
  }
  func.func @transform_0(%arg0: i32) -> (i32, i32) {
    %c0_i32 = arith.constant 0 : i32
    %c0_i32_0 = arith.constant 0 : i32
    return %arg0, %c0_i32 : i32, i32
  }
  func.func @transform_1(%arg0: i32) -> (i32, i32) {
    %c0_i32 = arith.constant 0 : i32
    %c0_i32_0 = arith.constant 0 : i32
    %c0_i32_1 = arith.constant 0 : i32
    return %c0_i32, %c0_i32_0 : i32, i32
  }
  func.func @transform_2(%arg0: i32) -> (i32, i32) {
    %c0_i32 = arith.constant 0 : i32
    %c0_i32_0 = arith.constant 0 : i32
    return %arg0, %c0_i32 : i32, i32
  }
}

</mosaic_0001>

<llo_original>
// kernel: tpu_custom_call.1
$region0: #{tpu_custom_call.1}
  #allocation0 [shape = 'u32[]', space=smem, size = 0x4, offset = 0x4, fixed_abs, tag = 'smem constant byte address 0x4 - core index']
  #allocation1 [shape = 'u32[144,128]{1,0:T(1,128)}', space=vmem, size = 0x12000, scoped, tag = 'internal scratch']
  %s0 = inlined_call_operand.vmem [shape: f32[8,1], index: 0, kind: input, shape index: {}]
  %s1 = inlined_call_operand.vmem [shape: f32[1,16], index: 1, kind: input, shape index: {}]
  %s2 = inlined_call_operand.hbm [shape: f32[8,32], index: 2, kind: output, shape index: {}]
  %s3 = sld [smem:[#allocation0]]
  $region18: #{tpu_custom_call.1} parent=0
    _
  %s5 = ssub.s32 1, %s3
  %s6 = scalar_select 0, %s5, %s3
  $region1: #{tpu_custom_call.1} parent=0
    #allocation2 [shape = 'u8[4096]{0}', space=vmem, size = 0x1000, scoped, tag = 'output window, operand 0, single buffered']
    #allocation3 [shape = 's32[1]{0}', space=sflag, size = 0x4, scoped, tag = 'scoped memory for tpu_custom_call.1']
    %7 = vsyncpa [#allocation3], 0
    // Predicated region
    $region2: #{tpu_custom_call.1} parent=1 // pred_check
      _
    $region3: #{tpu_custom_call.1} parent=1 // pred_check_branch
      %9 = sbr.rel (0) target = $region5
    $region4: #{tpu_custom_call.1} parent=1 // pred_region
      _
    $region5: #{tpu_custom_call.1} parent=1 // pred_fallthru
      _
    // Predicated region
    $region6: #{tpu_custom_call.1} parent=1 // pred_check
      _
    $region7: #{tpu_custom_call.1} parent=1 // pred_check_branch
      %11 = sbr.rel (0) target = $region9
    $region8: #{tpu_custom_call.1} parent=1 // pred_region
      _
    $region9: #{tpu_custom_call.1} parent=1 // pred_fallthru
      _
    %v12 = vld [vmem:[%s0] sm:$0xff]
    %v13 = vld [vmem:[%s1] sm:$0x1]
    %15 = vset.pattern.permute.xlu0 0
    %16 = vperm.xlu0 %15, %v12
    %v17 = vpop.permute.xlu0 %16
    %v20 = vlaneseq
    %v21 = vshrl.u32 %v20, 7
    %v22 = vsub.s32 0, %v21
    %v23 = vrot.slane %v13, %v22
    %v25 = vmul.f32 %v17, %v23
    %v26 = vmul.f32 %v25, 0.63661975
    %v27 = vadd.f32 %v26, 0.5
    %v28 = vfloor.f32 %v27
    %v29 = vcvt.f32.s32.to.zero.pseudo %v28
    %v30 = vmul.f32 %v28, 1.5703125
    %v31 = vsub.f32 %v25, %v30
    %v32 = vmul.f32 %v28, 0.00048351288
    %v33 = vsub.f32 %v31, %v32
    %v34 = vmul.f32 %v28, 3.138557e-07
    %v35 = vsub.f32 %v33, %v34
    %v36 = vmul.f32 %v28, 6.0771006e-11
    %v37 = vsub.f32 %v35, %v36
    %v38 = vmul.f32 %v37, %v37
    %v39 = vmul.f32 %v38, -0.00019515296
    %v40 = vadd.f32 %v39, 0.008332161
    %v41 = vmul.f32 %v40, %v38
    %v42 = vadd.f32 %v41, -0.16666655
    %v43 = vmul.f32 %v42, %v38
    %v44 = vmul.f32 %v43, %v37
    %v45 = vadd.f32 %v44, %v37
    %v46 = vmul.f32 %v38, 2.4433157e-05
    %v47 = vadd.f32 %v46, -0.0013887316
    %v48 = vmul.f32 %v47, %v38
    %v49 = vadd.f32 %v48, 0.041666646
    %v50 = vmul.f32 %v49, %v38
    %v51 = vmul.f32 %v50, %v38
    %v52 = vmul.f32 %v38, 0.5
    %v53 = vsub.f32 %v51, %v52
    %v54 = vadd.f32 %v53, 1.0
    %v55 = vand.u32 %v29, 1
    %vm56 = vcmp.eq.s32.totalorder %v55, 1
    %v57 = vand.u32 %v29, 2
    %vm58 = vcmp.ne.s32.totalorder %v57, 0
    %v59 = vadd.s32 %v29, 1
    %v60 = vand.u32 %v59, 2
    %vm61 = vcmp.ne.s32.totalorder %v60, 0
    %v62 = vsel %vm56, %v54, %v45
    %v63 = vsel %vm56, %v45, %v54
    %v64 = vsub.f32 0.0, %v62
    %v65 = vsel %vm58, %v64, %v62
    %v66 = vsub.f32 0.0, %v63
    %v67 = vsel %vm61, %v66, %v63
    %vm68 = vcmask 130048
    %69 = vst.msk [vmem:[#allocation2] sm:$0xff] %vm68, %v65
    %71 = vrot.lane.b32.xlu0 %v67, 16
    %v72 = vpop.permute.xlu0 %71
    %vm74 = vcmask 261248
    %75 = vst.msk [vmem:[#allocation2] sm:$0xff] %vm74, %v72
    // Predicated region
    $region10: #{tpu_custom_call.1} parent=1 // pred_check
      _
    $region11: #{tpu_custom_call.1} parent=1 // pred_check_branch
      %77 = sbr.rel (0) target = $region13
    $region12: #{tpu_custom_call.1} parent=1 // pred_region
      %s79 = ssub.s32 128, 128
      %80 = vsyncadd [#allocation3], %s79
      %s82 = sshll.u32 [#allocation2], 4
      %s83 = int_to_ptr.vmem [resolvable:$true] %s82
      %85 = dma.vmem_to_hbm [thread:$0]  %s83, 128, %s2, [#allocation3]
    $region13: #{tpu_custom_call.1} parent=1 // pred_fallthru
      _
    // Predicated region
    $region14: #{tpu_custom_call.1} parent=1 // pred_check
      _
    $region15: #{tpu_custom_call.1} parent=1 // pred_check_branch
      %87 = sbr.rel (0) target = $region17
    $region16: #{tpu_custom_call.1} parent=1 // pred_region
      %88 = dma.done [#allocation3], 128
    $region17: #{tpu_custom_call.1} parent=1 // pred_fallthru
      _
    %89 = vsyncpa [#allocation3], 1

</llo_original>
